<compile_context>
chip_gen: v7x
topology: tpu7x:2x2x1
jax: 0.10.0
libtpu: 0.0.40
codegen_flags: <defaults>
</compile_context>

<pallas_src>
import functools

import jax
import jax.numpy as jnp
from jax.experimental import pallas as pl
from jax.experimental.pallas import tpu as pltpu

LANES = 128
SUBLANES = 8
# (2048, 128) f32 block = 1 MiB; 2 inputs x 2 pipeline buffers (+ output
# buffers on the 'none' path) stays far below the default scoped-VMEM limit
# on v5e/v6e/v7x, so a single code path is valid on all generations.
TARGET_TILE_ROWS = 2048
# Leading parallel grid axis so v7x's two TensorCores both work on the
# reduction; on single-TC v5e/v6e the two splits just run back-to-back.
NSPLIT = 2


def _hinge_partial_sum_kernel(out_ref, tgt_ref, acc_ref):
    """Per-core-split (8, 128) partial sums of max(1 - t*o, 0)."""
    @pl.when(pl.program_id(1) == 0)
    def _():
        acc_ref[...] = jnp.zeros_like(acc_ref)

    o = out_ref[...].astype(jnp.float32)
    t = tgt_ref[...].astype(jnp.float32)
    h = jnp.maximum(1.0 - t * o, 0.0)                    # (tile_rows, LANES)
    # Fold tile rows into one vreg-shaped partial: pure VPU adds in the hot
    # loop (hidden under the DMA); the cross-lane/sublane reduce happens
    # exactly once, outside the kernel, on the tiny partial output.
    acc_ref[...] += h.reshape(-1, SUBLANES, LANES).sum(axis=0)


def _hinge_none_kernel(out_ref, tgt_ref, o_ref):
    """Elementwise hinge: max(1 - t*o, 0)."""
    o = out_ref[...].astype(jnp.float32)
    t = tgt_ref[...].astype(jnp.float32)
    o_ref[...] = jnp.maximum(1.0 - t * o, 0.0).astype(o_ref.dtype)


def _round_up(x, m):
    return ((x + m - 1) // m) * m


def _to_slab(x, rows_padded):
    """Flatten to (rows_padded, LANES); pad with 1s (hinge(1, 1) == 0)."""
    flat = x.reshape(-1)
    pad = rows_padded * LANES - flat.shape[0]
    if pad:
        flat = jnp.pad(flat, (0, pad), constant_values=1)
    return flat.reshape(rows_padded, LANES)


@functools.partial(jax.jit, static_argnames=("reduction",))
def hinge_loss(outputs, targets, reduction="mean"):
    if reduction not in ("mean", "sum", "none"):
        raise ValueError("Invalid reduction mode. Use 'mean', 'sum', or 'none'.")

    outputs, targets = jnp.broadcast_arrays(outputs, targets)
    orig_shape = outputs.shape
    n = outputs.size

    out_dtype = jnp.result_type(outputs.dtype, targets.dtype)
    if not jnp.issubdtype(out_dtype, jnp.floating):
        out_dtype = jnp.float32

    rows = pl.cdiv(n, LANES)
    in_itemsize = jnp.dtype(outputs.dtype).itemsize + jnp.dtype(targets.dtype).itemsize

    if reduction == "none":
        tile_rows = min(TARGET_TILE_ROWS, _round_up(rows, SUBLANES))
        rows_padded = _round_up(rows, tile_rows)
        o2 = _to_slab(outputs, rows_padded)
        t2 = _to_slab(targets, rows_padded)
        n_tiles = rows_padded // tile_rows
        n_pad_elems = rows_padded * LANES

        out = pl.pallas_call(
            _hinge_none_kernel,
            out_shape=jax.ShapeDtypeStruct((rows_padded, LANES), out_dtype),
            grid_spec=pltpu.PrefetchScalarGridSpec(
                num_scalar_prefetch=0,
                grid=(n_tiles,),
                in_specs=[
                    pl.BlockSpec((tile_rows, LANES), lambda i: (i, 0)),
                    pl.BlockSpec((tile_rows, LANES), lambda i: (i, 0)),
                ],
                out_specs=pl.BlockSpec((tile_rows, LANES), lambda i: (i, 0)),
            ),
            compiler_params=pltpu.CompilerParams(
                dimension_semantics=("parallel",)),
            cost_estimate=pl.CostEstimate(
                flops=3 * n_pad_elems,
                transcendentals=0,
                bytes_accessed=n_pad_elems * (in_itemsize
                                              + jnp.dtype(out_dtype).itemsize)),
        )(o2, t2)
        return out.reshape(-1)[:n].reshape(orig_shape)

    # 'mean' / 'sum': per-core-split (8, 128) vector accumulators held resident
    # across the serial (arbitrary) grid axis; final reduce done in plain JAX.
    # Choose tile_rows so padded reads stay close to the true element count
    # even for sizes just over a tile multiple (e.g. rows = 2049).
    tile_rows = min(TARGET_TILE_ROWS,
                    _round_up(pl.cdiv(rows, NSPLIT), SUBLANES))
    tiles_per_split = pl.cdiv(pl.cdiv(rows, tile_rows), NSPLIT)
    rows_padded = NSPLIT * tiles_per_split * tile_rows
    o2 = _to_slab(outputs, rows_padded)
    t2 = _to_slab(targets, rows_padded)
    n_pad_elems = rows_padded * LANES

    def in_map(c, i):
        return (c * tiles_per_split + i, 0)

    partials = pl.pallas_call(
        _hinge_partial_sum_kernel,
        out_shape=jax.ShapeDtypeStruct((NSPLIT * SUBLANES, LANES), jnp.float32),
        grid_spec=pltpu.PrefetchScalarGridSpec(
            num_scalar_prefetch=0,
            grid=(NSPLIT, tiles_per_split),
            in_specs=[
                pl.BlockSpec((tile_rows, LANES), in_map),
                pl.BlockSpec((tile_rows, LANES), in_map),
            ],
            out_specs=pl.BlockSpec((SUBLANES, LANES), lambda c, i: (c, 0)),
        ),
        compiler_params=pltpu.CompilerParams(
            dimension_semantics=("parallel", "arbitrary")),
        cost_estimate=pl.CostEstimate(
            flops=4 * n_pad_elems,
            transcendentals=0,
            bytes_accessed=n_pad_elems * in_itemsize
                           + NSPLIT * SUBLANES * LANES * 4),
    )(o2, t2)

    total = jnp.sum(partials)
    if reduction == "sum":
        return total
    return total / jnp.float32(n)


if __name__ == "__main__":
    key = jax.random.PRNGKey(0)
    k1, k2, k3, k4 = jax.random.split(key, 4)

    # Demo shapes: batch=16, features=128 (model outputs vs. ±1 targets).
    outputs = jax.random.normal(k1, (16, 128), dtype=jnp.float32)
    targets = jnp.sign(jax.random.normal(k2, (16, 128), dtype=jnp.float32))
    targets = jnp.where(targets == 0, 1.0, targets)

    ref_elem = jnp.maximum(1.0 - targets * outputs, 0.0)

    out_mean = jax.block_until_ready(hinge_loss(outputs, targets, "mean"))
    out_sum = jax.block_until_ready(hinge_loss(outputs, targets, "sum"))
    out_none = jax.block_until_ready(hinge_loss(outputs, targets, "none"))

    assert jnp.allclose(out_mean, jnp.mean(ref_elem), rtol=1e-5, atol=1e-5)
    assert jnp.allclose(out_sum, jnp.sum(ref_elem), rtol=1e-5, atol=1e-5)
    assert jnp.allclose(out_none, ref_elem, rtol=1e-5, atol=1e-5)

    # Unaligned shape to exercise the padding path (pad value 1 -> hinge 0).
    outputs_u = jax.random.normal(k3, (7, 33), dtype=jnp.float32)
    targets_u = jnp.sign(jax.random.normal(k4, (7, 33), dtype=jnp.float32))
    targets_u = jnp.where(targets_u == 0, 1.0, targets_u)
    ref_u = jnp.maximum(1.0 - targets_u * outputs_u, 0.0)

    u_mean = jax.block_until_ready(hinge_loss(outputs_u, targets_u, "mean"))
    u_sum = jax.block_until_ready(hinge_loss(outputs_u, targets_u, "sum"))
    u_none = jax.block_until_ready(hinge_loss(outputs_u, targets_u, "none"))
    assert jnp.allclose(u_mean, jnp.mean(ref_u), rtol=1e-5, atol=1e-5)
    assert jnp.allclose(u_sum, jnp.sum(ref_u), rtol=1e-5, atol=1e-5)
    assert jnp.allclose(u_none, ref_u, rtol=1e-5, atol=1e-5)

    print("KERNEL_OK")
</pallas_src>

<mosaic_0001>
module attributes {stable_mosaic.version = 11 : i64} {
  func.func @_hinge_partial_sum_kernel(%arg0: i32, %arg1: i32, %arg2: memref<8x128xf32, #tpu.memory_space<vmem>>, %arg3: memref<8x128xf32, #tpu.memory_space<vmem>>, %arg4: memref<8x128xf32, #tpu.memory_space<vmem>>) attributes {dimension_semantics = [#tpu.dimension_semantics<parallel>, #tpu.dimension_semantics<arbitrary>], iteration_bounds = array<i64: 2, 1>, scalar_prefetch = 0 : i64, scratch_operands = 0 : i64, tpu.core_type = #tpu.core_type<tc>, window_params = [{transform_indices = @transform_0, window_bounds = array<i64: 8, 128>}, {transform_indices = @transform_1, window_bounds = array<i64: 8, 128>}, {transform_indices = @transform_2, window_bounds = array<i64: 8, 128>}]} {
    %c0_i32 = arith.constant 0 : i32
    %0 = arith.cmpi eq, %arg1, %c0_i32 : i32
    %1 = arith.extui %0 : i1 to i32
    %c0_i32_0 = arith.constant 0 : i32
    %2 = arith.cmpi ne, %1, %c0_i32_0 : i32
    scf.if %2 {
      %cst_10 = arith.constant 0.000000e+00 : f32
      %15 = vector.broadcast %cst_10 : f32 to vector<8x128xf32>
      %c0_11 = arith.constant 0 : index
      %c0_12 = arith.constant 0 : index
      %16 = vector.load %arg4[%c0_11, %c0_12] : memref<8x128xf32, #tpu.memory_space<vmem>>, vector<8x128xf32>
      tpu.vector_store %arg4[%c0_11, %c0_12], %15 {strides = array<i32>} : memref<8x128xf32, #tpu.memory_space<vmem>>, vector<8x128xf32>,
    } else {
    }
    %c0 = arith.constant 0 : index
    %c0_1 = arith.constant 0 : index
    %3 = vector.load %arg2[%c0, %c0_1] : memref<8x128xf32, #tpu.memory_space<vmem>>, vector<8x128xf32>
    %c0_2 = arith.constant 0 : index
    %c0_3 = arith.constant 0 : index
    %4 = vector.load %arg3[%c0_2, %c0_3] : memref<8x128xf32, #tpu.memory_space<vmem>>, vector<8x128xf32>
    %5 = arith.mulf %4, %3 : vector<8x128xf32>
    %cst = arith.constant 1.000000e+00 : f32
    %6 = vector.broadcast %cst : f32 to vector<8x128xf32>
    %7 = arith.subf %6, %5 : vector<8x128xf32>
    %cst_4 = arith.constant 0.000000e+00 : f32
    %8 = vector.broadcast %cst_4 : f32 to vector<8x128xf32>
    %9 = arith.maximumf %7, %8 : vector<8x128xf32>
    %c0_5 = arith.constant 0 : index
    %c0_6 = arith.constant 0 : index
    %10 = vector.load %arg4[%c0_5, %c0_6] : memref<8x128xf32, #tpu.memory_space<vmem>>, vector<8x128xf32>
    %11 = vector.shape_cast %9 : vector<8x128xf32> to vector<1x8x128xf32>
    %cst_7 = arith.constant dense<0.000000e+00> : vector<8x128xf32>
    %12 = vector.multi_reduction <add>, %11, %cst_7 [0] : vector<1x8x128xf32> to vector<8x128xf32>
    %13 = arith.addf %10, %12 : vector<8x128xf32>
    %c0_8 = arith.constant 0 : index
    %c0_9 = arith.constant 0 : index
    %14 = vector.load %arg4[%c0_8, %c0_9] : memref<8x128xf32, #tpu.memory_space<vmem>>, vector<8x128xf32>
    tpu.vector_store %arg4[%c0_8, %c0_9], %13 {strides = array<i32>} : memref<8x128xf32, #tpu.memory_space<vmem>>, vector<8x128xf32>,
    return
  }
  func.func @transform_0(%arg0: i32, %arg1: i32) -> (i32, i32) {
    %c1_i32 = arith.constant 1 : i32
    %0 = arith.muli %arg0, %c1_i32 : i32
    %1 = arith.addi %0, %arg1 : i32
    %c0_i32 = arith.constant 0 : i32
    %c0_i32_0 = arith.constant 0 : i32
    return %1, %c0_i32 : i32, i32
  }
  func.func @transform_1(%arg0: i32, %arg1: i32) -> (i32, i32) {
    %c1_i32 = arith.constant 1 : i32
    %0 = arith.muli %arg0, %c1_i32 : i32
    %1 = arith.addi %0, %arg1 : i32
    %c0_i32 = arith.constant 0 : i32
    %c0_i32_0 = arith.constant 0 : i32
    return %1, %c0_i32 : i32, i32
  }
  func.func @transform_2(%arg0: i32, %arg1: i32) -> (i32, i32) {
    %c0_i32 = arith.constant 0 : i32
    %c0_i32_0 = arith.constant 0 : i32
    return %arg0, %c0_i32 : i32, i32
  }
}

</mosaic_0001>

<llo_original>
// kernel: hinge_loss.1
$region0: #{hinge_loss.1}
  #allocation0 [shape = 'u32[]', space=smem, size = 0x4, offset = 0x4, fixed_abs, tag = 'smem constant byte address 0x4 - core index']
  #allocation1 [shape = 'u32[144,128]{1,0:T(1,128)}', space=vmem, size = 0x12000, scoped, tag = 'internal scratch']
  %s0 = inlined_call_operand.hbm [shape: f32[16,128], index: 0, kind: input, shape index: {}]
  %s1 = inlined_call_operand.hbm [shape: f32[16,128], index: 1, kind: input, shape index: {}]
  %s2 = inlined_call_operand.vmem [shape: f32[16,128], index: 2, kind: output, shape index: {}]
  %s3 = sld [smem:[#allocation0]]
  $region53: #{hinge_loss.1} parent=0
    _
  %s5 = ssub.s32 1, %s3
  %s6 = scalar_select 0, %s5, %s3
  $region1: #{hinge_loss.1} parent=0
    #allocation2 [shape = 'u8[8192]{0}', space=vmem, size = 0x2000, scoped, tag = 'input window, operand 0']
    #allocation3 [shape = 's32[2]{0}', space=sflag, size = 0x8, scoped, tag = 'scoped memory for hinge_loss.1']
    #allocation4 [shape = 'u8[8192]{0}', space=vmem, size = 0x2000, scoped, tag = 'input window, operand 1']
    #allocation5 [shape = 's32[2]{0}', space=sflag, size = 0x8, scoped, tag = 'scoped memory for hinge_loss.1']
    %7 = vsyncpa [#allocation3], 0
    %s8 = scalar_lea.sflag [#allocation3], 1
    %9 = vsyncpa %s8, 0
    %10 = vsyncpa [#allocation5], 0
    %s11 = scalar_lea.sflag [#allocation5], 1
    %12 = vsyncpa %s11, 0
    loop: start=0, step=1, limit=4
    $region2: #{hinge_loss.1} parent=1 // loop_pre_header
      _
    $region3: #{hinge_loss.1} parent=1 // loop_header
      %s14 = sphi 0, %s18
      %p15 = scmp.ge.s32.totalorder %s14, 4
      %s21 = sphi 0, %s33
      %s22 = sphi 0, %s29
      %s23 = sphi 0, %s21
      %s24 = sphi 0, %s22
      %s25 = sphi 0, %s23
      %s26 = sphi 0, %s24
      %s38 = sphi 0, %s40
      %s41 = sphi 0, %s38
      %s42 = sphi 0, %s41
      %s58 = sphi 0, %s42
      %s66 = sphi 0, %s68
      %s69 = sphi 0, %s66
      %s70 = sphi 0, %s69
      %s86 = sphi 0, %s70
      %s92 = sphi 0, %s94
      %s95 = sphi 0, %s92
      %s96 = sphi 0, %s95
      %s112 = sphi 0, %s96
    $region4: #{hinge_loss.1} parent=1 // loop_header_branch
      %17 = sbr.rel (%p15) target = $region8
    $region5: #{hinge_loss.1} parent=1 // loop_body
      %s19 = ssub.s32 %s14, 1
      %s20 = ssub.s32 %s14, 2
      %s27 = sadd.s32 1, %s22
      %p28 = scmp.ge.s32.totalorder %s27, 1
      %s29 = scalar_select %p28, 0, %s27
      %s30 = sadd.s32 1, %s21
      %s31 = scalar_select %p28, %s30, %s21
      %p32 = scmp.ge.s32.totalorder %s31, 2
      %s33 = scalar_select %p32, 0, %s31
      %s34 = sadd.s32 %s21, %s22
      %s35 = sadd.s32 %s33, %s29
      %s36 = ssub.s32 %s34, %s35
      %p37 = scmp.eq.s32.totalorder %s36, 0
      %s39 = sadd.s32 %s38, 1
      %s40 = scalar_select %p37, %s38, %s39
      %p43 = pneg %p37
      %p44 = scmp.eq.s32.totalorder %s14, 1
      %p45 = por %p43, %p44
      %p46 = scmp.ne.s32.totalorder %s38, %s41
      %p47 = scmp.eq.s32.totalorder %s14, 0
      %p48 = por %p46, %p47
      %p49 = scmp.ne.s32.totalorder %s38, %s41
      %p50 = scmp.eq.s32.totalorder %s19, 1
      %p51 = por %p49, %p50
      %p52 = scmp.ne.s32.totalorder %s41, %s42
      %p53 = scmp.eq.s32.totalorder %s19, 0
      %p54 = por %p52, %p53
      %p55 = scmp.ne.s32.totalorder %s41, %s42
      %p56 = scmp.eq.s32.totalorder %s20, 1
      %p57 = por %p55, %p56
      %p59 = scmp.ne.s32.totalorder %s42, %s58
      %p60 = scmp.eq.s32.totalorder %s20, 0
      %p61 = por %p59, %p60
      %s62 = sadd.s32 %s21, %s22
      %s63 = sadd.s32 %s33, %s29
      %s64 = ssub.s32 %s62, %s63
      %p65 = scmp.eq.s32.totalorder %s64, 0
      %s67 = sadd.s32 %s66, 1
      %s68 = scalar_select %p65, %s66, %s67
      %p71 = pneg %p65
      %p72 = scmp.eq.s32.totalorder %s14, 1
      %p73 = por %p71, %p72
      %p74 = scmp.ne.s32.totalorder %s66, %s69
      %p75 = scmp.eq.s32.totalorder %s14, 0
      %p76 = por %p74, %p75
      %p77 = scmp.ne.s32.totalorder %s66, %s69
      %p78 = scmp.eq.s32.totalorder %s19, 1
      %p79 = por %p77, %p78
      %p80 = scmp.ne.s32.totalorder %s69, %s70
      %p81 = scmp.eq.s32.totalorder %s19, 0
      %p82 = por %p80, %p81
      %p83 = scmp.ne.s32.totalorder %s69, %s70
      %p84 = scmp.eq.s32.totalorder %s20, 1
      %p85 = por %p83, %p84
      %p87 = scmp.ne.s32.totalorder %s70, %s86
      %p88 = scmp.eq.s32.totalorder %s20, 0
      %p89 = por %p87, %p88
      %s90 = ssub.s32 %s21, %s33
      %p91 = scmp.eq.s32.totalorder %s90, 0
      %s93 = sadd.s32 %s92, 1
      %s94 = scalar_select %p91, %s92, %s93
      %p97 = pneg %p91
      %p98 = scmp.eq.s32.totalorder %s14, 1
      %p99 = por %p97, %p98
      %p100 = scmp.ne.s32.totalorder %s92, %s95
      %p101 = scmp.eq.s32.totalorder %s14, 0
      %p102 = por %p100, %p101
      %p103 = scmp.ne.s32.totalorder %s92, %s95
      %p104 = scmp.eq.s32.totalorder %s19, 1
      %p105 = por %p103, %p104
      %p106 = scmp.ne.s32.totalorder %s95, %s96
      %p107 = scmp.eq.s32.totalorder %s19, 0
      %p108 = por %p106, %p107
      %p109 = scmp.ne.s32.totalorder %s95, %s96
      %p110 = scmp.eq.s32.totalorder %s20, 1
      %p111 = por %p109, %p110
      %p113 = scmp.ne.s32.totalorder %s96, %s112
      %p114 = scmp.eq.s32.totalorder %s20, 0
      %p115 = por %p113, %p114
      %p116 = scmp.le.s32.totalorder 1, %s14
      %p117 = scmp.lt.s32.totalorder %s14, 3
      %p118 = pnand %p116, %p117
      %p119 = pneg %p118
      // Predicated region
      $region9: #{hinge_loss.1} parent=5 // pred_check
        _
      $region10: #{hinge_loss.1} parent=5 // pred_check_branch
        %121 = sbr.rel (%p118) target = $region12
      $region11: #{hinge_loss.1} parent=5 // pred_region
        %s122 = ssub.s32 %s14, 1
      $region12: #{hinge_loss.1} parent=5 // pred_fallthru
        _
      %p123 = scmp.lt.s32.totalorder %s14, 2
      // Predicated region
      $region13: #{hinge_loss.1} parent=5 // pred_check
        %p124 = pneg %p123
      $region14: #{hinge_loss.1} parent=5 // pred_check_branch
        %126 = sbr.rel (%p124) target = $region16
      $region15: #{hinge_loss.1} parent=5 // pred_region
        // Predicated region
        $region17: #{hinge_loss.1} parent=15 // pred_check
          %p127 = pneg %p48
        $region18: #{hinge_loss.1} parent=15 // pred_check_branch
          %129 = sbr.rel (%p127) target = $region20
        $region19: #{hinge_loss.1} parent=15 // pred_region
          %s130 = sand.u32 %s38, 1
          %s131 = scalar_lea.sflag [#allocation3], %s130
          %s132 = sand.u32 %s38, 1
          %s133 = smul.addr %s132, 8
          %s134 = scalar_lea.vmem [#allocation2], %s133
          %s135 = sadd.s32 %s21, %s22
          %s137 = ssub.s32 128, 128
          %138 = vsyncadd %s131, %s137
          %s139 = smul.addr %s135, 128
          %s140 = scalar_lea.hbm %s0, %s139
          %s142 = sshll.u32 %s134, 4
          %s143 = int_to_ptr.vmem [resolvable:$true] %s142
          %145 = dma.hbm_to_vmem [thread:$0]  %s140, 128, %s143, %s131
        $region20: #{hinge_loss.1} parent=15 // pred_fallthru
          _
        // Predicated region
        $region21: #{hinge_loss.1} parent=15 // pred_check
          %p146 = pneg %p76
        $region22: #{hinge_loss.1} parent=15 // pred_check_branch
          %148 = sbr.rel (%p146) target = $region24
        $region23: #{hinge_loss.1} parent=15 // pred_region
          %s149 = sand.u32 %s66, 1
          %s150 = scalar_lea.sflag [#allocation5], %s149
          %s151 = sand.u32 %s66, 1
          %s152 = smul.addr %s151, 8
          %s153 = scalar_lea.vmem [#allocation4], %s152
          %s154 = sadd.s32 %s21, %s22
          %s156 = ssub.s32 128, 128
          %157 = vsyncadd %s150, %s156
          %s158 = smul.addr %s154, 128
          %s159 = scalar_lea.hbm %s1, %s158
          %s161 = sshll.u32 %s153, 4
          %s162 = int_to_ptr.vmem [resolvable:$true] %s161
          %164 = dma.hbm_to_vmem [thread:$0]  %s159, 128, %s162, %s150
        $region24: #{hinge_loss.1} parent=15 // pred_fallthru
          _
      $region16: #{hinge_loss.1} parent=5 // pred_fallthru
        _
      %p165 = scmp.le.s32.totalorder 1, %s14
      %p166 = scmp.lt.s32.totalorder %s14, 3
      %p167 = pnand %p165, %p166
      %p168 = pneg %p167
      // Predicated region
      $region25: #{hinge_loss.1} parent=5 // pred_check
        _
      $region26: #{hinge_loss.1} parent=5 // pred_check_branch
        %170 = sbr.rel (%p167) target = $region28
      $region27: #{hinge_loss.1} parent=5 // pred_region
        %s171 = ssub.s32 %s14, 1
        %s172 = sand.u32 %s41, 1
        %s173 = scalar_lea.sflag [#allocation3], %s172
        %s174 = sand.u32 %s41, 1
        %s175 = smul.addr %s174, 8
        %s176 = scalar_lea.vmem [#allocation2], %s175
        // Predicated region
        $region29: #{hinge_loss.1} parent=27 // pred_check
          %p177 = pneg %p54
        $region30: #{hinge_loss.1} parent=27 // pred_check_branch
          %179 = sbr.rel (%p177) target = $region32
        $region31: #{hinge_loss.1} parent=27 // pred_region
          %180 = dma.done %s173, 128
        $region32: #{hinge_loss.1} parent=27 // pred_fallthru
          _
        %s181 = sand.u32 %s69, 1
        %s182 = scalar_lea.sflag [#allocation5], %s181
        %s183 = sand.u32 %s69, 1
        %s184 = smul.addr %s183, 8
        %s185 = scalar_lea.vmem [#allocation4], %s184
        // Predicated region
        $region33: #{hinge_loss.1} parent=27 // pred_check
          %p186 = pneg %p82
        $region34: #{hinge_loss.1} parent=27 // pred_check_branch
          %188 = sbr.rel (%p186) target = $region36
        $region35: #{hinge_loss.1} parent=27 // pred_region
          %189 = dma.done %s182, 128
        $region36: #{hinge_loss.1} parent=27 // pred_fallthru
          _
        %s190 = sand.u32 %s41, 1
        %s191 = scalar_lea.sflag [#allocation3], %s190
        %s192 = sand.u32 %s41, 1
        %s193 = smul.addr %s192, 8
        %s194 = scalar_lea.vmem [#allocation2], %s193
        %p195 = pneg %p54
        %p196 = pneg %p51
        %s197 = sand.u32 %s69, 1
        %s198 = scalar_lea.sflag [#allocation5], %s197
        %s199 = sand.u32 %s69, 1
        %s200 = smul.addr %s199, 8
        %s201 = scalar_lea.vmem [#allocation4], %s200
        %p202 = pneg %p82
        %p203 = pneg %p79
        %p204 = pneg %p108
        %p205 = pneg %p105
        %p206 = scmp.lt.s32.totalorder %s23, 1
        %s207 = scalar_select %p206, %s23, 1
        %s208 = smul.addr %s207, 8
        %s209 = scalar_lea.vmem %s2, %s208
        %s210 = sadd.s32 %s23, %s24
        %s211 = sadd.s32 %s23, %s24
        %p212 = scmp.lt.s32.totalorder %s23, 1
        %s213 = scalar_select %p212, %s23, 1
        %s214 = smul.addr %s213, 8
        %s215 = scalar_lea.vmem %s2, %s214
        %p216 = scmp.eq.s32.totalorder %s24, 0
        // Predicated region
        $region37: #{hinge_loss.1} parent=27 // pred_check
          %p217 = pneg %p216
        $region38: #{hinge_loss.1} parent=27 // pred_check_branch
          %219 = sbr.rel (%p217) target = $region40
        $region39: #{hinge_loss.1} parent=27 // pred_region
          %220 = vst [vmem:[%s215] sm:$0xff] 0.0
        $region40: #{hinge_loss.1} parent=27 // pred_fallthru
          _
        %v221 = vld [vmem:[%s176] sm:$0xff]
        %v222 = vld [vmem:[%s185] sm:$0xff]
        %v223 = vmul.f32 %v222, %v221
        %v224 = vsub.f32 1.0, %v223
        %v225 = vmax.f32 %v224, 0.0
        %v226 = vld [vmem:[%s215] sm:$0xff]
        %v227 = vadd.f32 %v225, 0.0
        %v228 = vadd.f32 %v226, %v227
        %229 = vst [vmem:[%s215] sm:$0xff] %v228
        %p230 = scmp.lt.s32.totalorder %s23, 1
        %s231 = scalar_select %p230, %s23, 1
        %s232 = smul.addr %s231, 8
        %s233 = scalar_lea.vmem %s2, %s232
        // Predicated region
        $region41: #{hinge_loss.1} parent=27 // pred_check
          %p234 = pneg %p105
        $region42: #{hinge_loss.1} parent=27 // pred_check_branch
          %236 = sbr.rel (%p234) target = $region44
        $region43: #{hinge_loss.1} parent=27 // pred_region
          _
        $region44: #{hinge_loss.1} parent=27 // pred_fallthru
          _
      $region28: #{hinge_loss.1} parent=5 // pred_fallthru
        _
      %p237 = scmp.le.s32.totalorder 2, %s14
      // Predicated region
      $region45: #{hinge_loss.1} parent=5 // pred_check
        %p238 = pneg %p237
      $region46: #{hinge_loss.1} parent=5 // pred_check_branch
        %240 = sbr.rel (%p238) target = $region48
      $region47: #{hinge_loss.1} parent=5 // pred_region
        %s241 = ssub.s32 %s14, 2
        // Predicated region
        $region49: #{hinge_loss.1} parent=47 // pred_check
          %p242 = pneg %p111
        $region50: #{hinge_loss.1} parent=47 // pred_check_branch
          %244 = sbr.rel (%p242) target = $region52
        $region51: #{hinge_loss.1} parent=47 // pred_region
          %p245 = scmp.lt.s32.totalorder %s25, 1
          %s246 = scalar_select %p245, %s25, 1
          %s247 = smul.addr %s246, 8
          %s248 = scalar_lea.vmem %s2, %s247
        $region52: #{hinge_loss.1} parent=47 // pred_fallthru
          _
      $region48: #{hinge_loss.1} parent=5 // pred_fallthru
        _
    $region6: #{hinge_loss.1} parent=1 // loop_footer
      %s18 = sadd.s32 1, %s14
    $region7: #{hinge_loss.1} parent=1 // loop_footer_branch
      %13 = sbr.rel target = $region3
    $region8: #{hinge_loss.1} parent=1 // loop_exit
      _
    %249 = vsyncpa [#allocation3], 1
    %s250 = scalar_lea.sflag [#allocation3], 1
    %251 = vsyncpa %s250, 1
    %252 = vsyncpa [#allocation5], 1
    %s253 = scalar_lea.sflag [#allocation5], 1
    %254 = vsyncpa %s253, 1

</llo_original>
